<compile_context>
chip_gen: v5e
topology: v5e:2x2
jax: 0.10.0
libtpu: 0.0.40
codegen_flags: <defaults>
</compile_context>

<pallas_src>
import jax
import jax.numpy as jnp
from jax.experimental import pallas as pl
from jax.experimental.pallas import tpu as pltpu

_MIB = 1024 * 1024


def _round_up(x, m):
    return ((x + m - 1) // m) * m


def _cdiv(a, b):
    return -(-a // b)


def _vmem_budget_bytes():
    """Per-generation VMEM budget for double-buffered tiles (+ headroom)."""
    try:
        phys = int(pltpu.get_tpu_info().vmem_capacity_bytes)
    except Exception:
        phys = 64 * _MIB  # assume the smallest (v7x per-TC) when unknown
    # ~70% of physical, capped at 96 MiB: leaves room for Mosaic internal
    # scratch and the f32 epilogue intermediates on every generation
    # (v5e/v6e: ~90 MiB of 128, v7x: ~45 MiB of 64).
    return min(96 * _MIB, (phys * 7) // 10)


def _tile_vmem_bytes(tm, tn, tk, in_isz, out_isz):
    x_b = tm * tk * in_isz
    w_b = tk * 2 * tn * in_isz
    b_b = 2 * tn * 4
    o_b = tm * tn * out_isz
    acc_b = tm * 2 * tn * 4            # f32 accumulator scratch (single copy)
    return 2 * (x_b + w_b + b_b + o_b) + acc_b  # 2x = double buffering


def _select_tiles(in_dim, out_dim, in_isz, out_isz, budget):
    """Pick (tn, tm_cap, tk).  Shrink order: split K first, then tm, then tn."""
    np128 = _round_up(out_dim, 128)
    tn_cands = sorted(
        {t for t in (np128, 512, 384, 256, 128)
         if t <= 512 and t <= np128 and np128 % t == 0},
        reverse=True,
    ) or [128]
    tk_cands = [in_dim] + [t for t in (2048, 1024, 512) if t < in_dim]
    for tn in tn_cands:
        for tm_cap in (1024, 512, 256):
            for tk in tk_cands:
                if _tile_vmem_bytes(tm_cap, tn, tk, in_isz, out_isz) + 2 * _MIB <= budget:
                    return tn, tm_cap, tk
    return tn_cands[-1], 128, min(in_dim, 512)  # last-resort minimal config


def _glu_kernel(x_ref, w_ref, b_ref, o_ref, acc_ref):
    k = pl.program_id(2)

    @pl.when(k == 0)
    def _init():
        acc_ref[...] = jnp.zeros_like(acc_ref)

    # ONE wide MXU matmul per (tile, K-step).  Fused weight tile layout:
    #   columns [0:tn)   -> left projection
    #   columns [tn:2tn) -> right (gate) projection
    acc_ref[...] += jnp.dot(x_ref[...], w_ref[...],
                            preferred_element_type=jnp.float32)

    @pl.when(k == pl.num_programs(2) - 1)
    def _finalize():
        tn = o_ref.shape[-1]
        y = acc_ref[...] + b_ref[...]          # f32 bias add, broadcast over rows
        left = y[:, :tn]                       # split at a 128-lane boundary
        gate = jax.nn.sigmoid(y[:, tn:])       # EUP transcendental, f32 (v5e-safe)
        o_ref[...] = (left * gate).astype(o_ref.dtype)


def glu_init(wl, bl, wr, br, *, compute_dtype=None):
    """One-time parameter fusion (hoisted out of the per-call forward path).

    wl, wr : [in_dim, out_dim]   (pre-transposed nn.Linear weights)
    bl, br : [out_dim]
    compute_dtype: dtype fed to the MXU (use jnp.bfloat16 for full rate when
                   accuracy permits); epilogue stays f32 regardless.
    """
    in_dim, out_dim = wl.shape
    compute_dtype = jnp.dtype(compute_dtype if compute_dtype is not None else wl.dtype)
    in_isz = compute_dtype.itemsize
    out_isz = 4  # budget for the worst case (f32 activations / output)

    budget = _vmem_budget_bytes()
    tn, tm_cap, tk = _select_tiles(in_dim, out_dim, in_isz, out_isz, budget)

    Np = _round_up(out_dim, 128)
    assert Np % tn == 0
    Kp = in_dim if tk == in_dim else _round_up(in_dim, tk)
    grid_n = Np // tn

    # Fused lane-dense weight slab: per N tile j, columns are [Wl_j | Wr_j].
    wlp = jnp.pad(wl.astype(compute_dtype), ((0, Kp - in_dim), (0, Np - out_dim)))
    wrp = jnp.pad(wr.astype(compute_dtype), ((0, Kp - in_dim), (0, Np - out_dim)))
    w_fused = jnp.concatenate(
        [wlp.reshape(Kp, grid_n, tn), wrp.reshape(Kp, grid_n, tn)], axis=-1,
    ).reshape(Kp, grid_n * 2 * tn)

    blp = jnp.pad(bl.astype(jnp.float32), (0, Np - out_dim))
    brp = jnp.pad(br.astype(jnp.float32), (0, Np - out_dim))
    b_fused = jnp.concatenate(
        [blp.reshape(grid_n, tn), brp.reshape(grid_n, tn)], axis=-1,
    ).reshape(1, grid_n * 2 * tn)

    return dict(
        w_fused=w_fused, b_fused=b_fused,
        in_dim=in_dim, out_dim=out_dim, Np=Np, Kp=Kp,
        tn=tn, tk=tk, tm_cap=tm_cap,
        compute_dtype=compute_dtype, vmem_budget=budget,
    )


def glu_apply(params, x):
    """GLU forward.  x: [..., in_dim] -> [..., out_dim]."""
    in_dim, out_dim = params["in_dim"], params["out_dim"]
    Np, Kp = params["Np"], params["Kp"]
    tn, tk, tm_cap = params["tn"], params["tk"], params["tm_cap"]
    compute_dtype = params["compute_dtype"]
    w_fused, b_fused = params["w_fused"], params["b_fused"]

    lead_shape = x.shape[:-1]
    x2 = x.reshape(-1, in_dim)
    M = x2.shape[0]
    out_dtype = x.dtype

    # Balanced M tiling: avoids the ~2x padding blow-up of round_up(M, cap)
    # for M = cap+1..cap+7, keeps tm a multiple of 8.
    grid_m = max(1, _cdiv(M, tm_cap))
    tm = _round_up(_cdiv(M, grid_m), 8)
    Mp = _round_up(M, tm)
    grid_m = Mp // tm
    grid_n = Np // tn
    grid_k = Kp // tk

    # Only pad / cast when actually needed (pad + slice are whole extra HBM
    # passes over the activations).
    xp = x2 if x2.dtype == compute_dtype else x2.astype(compute_dtype)
    if Mp != M or Kp != in_dim:
        # K padding stays zero so the partial last K block cannot corrupt the
        # accumulator (weights were zero-padded once at init).
        xp = jnp.pad(xp, ((0, Mp - M), (0, Kp - in_dim)))

    in_isz = jnp.dtype(compute_dtype).itemsize
    out_isz = jnp.dtype(out_dtype).itemsize

    # Grid ordering, data-reuse aware: weight-stationary (N outer) re-streams
    # x (grid_n-1) extra times; x-stationary (M outer) re-streams the fused W
    # (grid_m-1) extra times.  Pick whichever re-reads fewer elements.
    weight_stationary = (grid_n - 1) * Mp <= (grid_m - 1) * 2 * Np
    if weight_stationary:
        grid = (grid_n, grid_m, grid_k)
        x_map = lambda n, m, k: (m, k)
        w_map = lambda n, m, k: (k, n)
        b_map = lambda n, m, k: (0, n)
        o_map = lambda n, m, k: (m, n)
    else:
        grid = (grid_m, grid_n, grid_k)
        x_map = lambda m, n, k: (m, k)
        w_map = lambda m, n, k: (k, n)
        b_map = lambda m, n, k: (0, n)
        o_map = lambda m, n, k: (m, n)

    # Scoped-VMEM limit derived from actual tile bytes (+ headroom), capped by
    # the per-generation budget.
    tile_bytes = _tile_vmem_bytes(tm, tn, tk, in_isz, out_isz)
    vmem_limit = int(min(params["vmem_budget"],
                         max(32 * _MIB, tile_bytes * 3 // 2 + 2 * _MIB)))

    # Cost estimate that accounts for the re-streamed operand.
    x_bytes = Mp * Kp * in_isz
    w_bytes = int(w_fused.size) * in_isz
    b_bytes = int(b_fused.size) * 4
    o_bytes = Mp * Np * out_isz
    if weight_stationary:
        read_bytes = grid_n * x_bytes + w_bytes + b_bytes
    else:
        read_bytes = x_bytes + grid_m * w_bytes + b_bytes
    cost = pl.CostEstimate(
        flops=2 * Mp * Kp * (2 * Np) + 4 * Mp * Np,
        transcendentals=Mp * Np,
        bytes_accessed=read_bytes + o_bytes,
    )

    out_padded = pl.pallas_call(
        _glu_kernel,
        out_shape=jax.ShapeDtypeStruct((Mp, Np), out_dtype),
        grid=grid,
        in_specs=[
            pl.BlockSpec((tm, tk), x_map),          # x tile
            pl.BlockSpec((tk, 2 * tn), w_map),      # fused [Wl|Wr] tile
            pl.BlockSpec((1, 2 * tn), b_map),       # fused bias tile (f32)
        ],
        out_specs=pl.BlockSpec((tm, tn), o_map),
        scratch_shapes=[pltpu.VMEM((tm, 2 * tn), jnp.float32)],  # K accumulator
        compiler_params=pltpu.CompilerParams(
            # Non-K axes independent (megacore-shardable on v7x); K is the
            # reduction axis and must be "arbitrary".
            dimension_semantics=("parallel", "parallel", "arbitrary"),
            vmem_limit_bytes=vmem_limit,
        ),
        cost_estimate=cost,
    )(xp, w_fused, b_fused)

    out = out_padded
    if Mp != M or Np != out_dim:
        out = out[:M, :out_dim]
    return out.reshape(*lead_shape, out_dim)


def glu_pallas(x, wl, bl, wr, br, *, compute_dtype=None):
    """Convenience one-shot wrapper (init + apply).  For repeated forwards,
    call glu_init once and reuse the params (weight fusion is hoisted)."""
    return glu_apply(glu_init(wl, bl, wr, br, compute_dtype=compute_dtype), x)


def glu_reference(x, wl, bl, wr, br):
    left = x @ wl + bl
    right = x @ wr + br
    return left * jax.nn.sigmoid(right)


if __name__ == "__main__":
    key = jax.random.PRNGKey(0)
    k_x, k_wl, k_bl, k_wr, k_br = jax.random.split(key, 5)

    # Small shapes consistent with the module: batch=2, seq=8, in_dim=32,
    # out_dim=64.  The wrapper flattens leading dims like nn.Linear does.
    batch, seq, in_dim, out_dim = 2, 8, 32, 64

    x = jax.random.normal(k_x, (batch, seq, in_dim), dtype=jnp.float32)

    # Deterministic init mimicking nn.Linear's uniform(-1/sqrt(in), 1/sqrt(in)).
    bound = 1.0 / (in_dim ** 0.5)
    wl = jax.random.uniform(k_wl, (in_dim, out_dim), jnp.float32, -bound, bound)
    bl = jax.random.uniform(k_bl, (out_dim,), jnp.float32, -bound, bound)
    wr = jax.random.uniform(k_wr, (in_dim, out_dim), jnp.float32, -bound, bound)
    br = jax.random.uniform(k_br, (out_dim,), jnp.float32, -bound, bound)

    # One-time weight fusion (hoisted), then the forward pass.
    params = glu_init(wl, bl, wr, br)            # compute_dtype=jnp.bfloat16 for full-rate MXU
    out = glu_apply(params, x)
    jax.block_until_ready(out)

    ref = glu_reference(x, wl, bl, wr, br)
    assert out.shape == (batch, seq, out_dim)
    assert jnp.allclose(out, ref, atol=1e-5, rtol=1e-5), "mismatch vs reference"

    print("KERNEL_OK")
</pallas_src>

<mosaic_0001>
module attributes {stable_mosaic.version = 11 : i64} {
  func.func @_glu_kernel(%arg0: i32, %arg1: i32, %arg2: i32, %arg3: memref<16x32xf32, #tpu.memory_space<vmem>>, %arg4: memref<32x256xf32, #tpu.memory_space<vmem>>, %arg5: memref<1x256xf32, #tpu.memory_space<vmem>>, %arg6: memref<16x128xf32, #tpu.memory_space<vmem>>, %arg7: memref<16x256xf32, #tpu.memory_space<vmem>>) attributes {dimension_semantics = [#tpu.dimension_semantics<parallel>, #tpu.dimension_semantics<parallel>, #tpu.dimension_semantics<arbitrary>], iteration_bounds = array<i64: 1, 1, 1>, scalar_prefetch = 0 : i64, scratch_operands = 1 : i64, tpu.core_type = #tpu.core_type<tc>, window_params = [{transform_indices = @transform_0, window_bounds = array<i64: 16, 32>}, {transform_indices = @transform_1, window_bounds = array<i64: 32, 256>}, {transform_indices = @transform_2, window_bounds = array<i64: 1, 256>}, {transform_indices = @transform_3, window_bounds = array<i64: 16, 128>}]} {
    %c0_i32 = arith.constant 0 : i32
    %0 = arith.cmpi eq, %arg2, %c0_i32 : i32
    %1 = arith.extui %0 : i1 to i32
    %c0_i32_0 = arith.constant 0 : i32
    %2 = arith.cmpi ne, %1, %c0_i32_0 : i32
    scf.if %2 {
      %cst_10 = arith.constant 0.000000e+00 : f32
      %12 = vector.broadcast %cst_10 : f32 to vector<16x256xf32>
      %c0_11 = arith.constant 0 : index
      %c0_12 = arith.constant 0 : index
      %13 = vector.load %arg7[%c0_11, %c0_12] : memref<16x256xf32, #tpu.memory_space<vmem>>, vector<16x256xf32>
      tpu.vector_store %arg7[%c0_11, %c0_12], %12 {strides = array<i32>} : memref<16x256xf32, #tpu.memory_space<vmem>>, vector<16x256xf32>,
    } else {
    }
    %c0 = arith.constant 0 : index
    %c0_1 = arith.constant 0 : index
    %3 = vector.load %arg7[%c0, %c0_1] : memref<16x256xf32, #tpu.memory_space<vmem>>, vector<16x256xf32>
    %c0_2 = arith.constant 0 : index
    %c0_3 = arith.constant 0 : index
    %4 = vector.load %arg3[%c0_2, %c0_3] : memref<16x32xf32, #tpu.memory_space<vmem>>, vector<16x32xf32>
    %c0_4 = arith.constant 0 : index
    %c0_5 = arith.constant 0 : index
    %5 = vector.load %arg4[%c0_4, %c0_5] : memref<32x256xf32, #tpu.memory_space<vmem>>, vector<32x256xf32>
    %cst = arith.constant dense<0.000000e+00> : vector<16x256xf32>
    %6 = tpu.matmul %4, %5, %cst {dimension_numbers = #tpu.dot_dimension_numbers<[1], [0], [0], [1], [0, 0, 1, 1], [], []>} : vector<16x32xf32>, vector<32x256xf32>, vector<16x256xf32> -> vector<16x256xf32>
    %7 = arith.addf %3, %6 : vector<16x256xf32>
    %c0_6 = arith.constant 0 : index
    %c0_7 = arith.constant 0 : index
    %8 = vector.load %arg7[%c0_6, %c0_7] : memref<16x256xf32, #tpu.memory_space<vmem>>, vector<16x256xf32>
    tpu.vector_store %arg7[%c0_6, %c0_7], %7 {strides = array<i32>} : memref<16x256xf32, #tpu.memory_space<vmem>>, vector<16x256xf32>,
    %c0_i32_8 = arith.constant 0 : i32
    %9 = arith.cmpi eq, %arg2, %c0_i32_8 : i32
    %10 = arith.extui %9 : i1 to i32
    %c0_i32_9 = arith.constant 0 : i32
    %11 = arith.cmpi ne, %10, %c0_i32_9 : i32
    scf.if %11 {
      %c0_10 = arith.constant 0 : index
      %c0_11 = arith.constant 0 : index
      %12 = vector.load %arg7[%c0_10, %c0_11] : memref<16x256xf32, #tpu.memory_space<vmem>>, vector<16x256xf32>
      %c0_12 = arith.constant 0 : index
      %c0_13 = arith.constant 0 : index
      %13 = vector.load %arg5[%c0_12, %c0_13] : memref<1x256xf32, #tpu.memory_space<vmem>>, vector<1x256xf32>
      %14 = vector.broadcast %13 : vector<1x256xf32> to vector<16x256xf32>
      %15 = arith.addf %12, %14 : vector<16x256xf32>
      %16 = vector.extract_strided_slice %15 {offsets = [0, 0], sizes = [16, 128], strides = [1, 1]} : vector<16x256xf32> to vector<16x128xf32>
      %17 = vector.extract_strided_slice %15 {offsets = [0, 128], sizes = [16, 128], strides = [1, 1]} : vector<16x256xf32> to vector<16x128xf32>
      %18 = arith.negf %17 : vector<16x128xf32>
      %19 = math.exp %18 : vector<16x128xf32>
      %cst_14 = arith.constant 1.000000e+00 : f32
      %20 = vector.broadcast %cst_14 : f32 to vector<16x128xf32>
      %21 = arith.addf %20, %19 : vector<16x128xf32>
      %22 = arith.divf %20, %21 : vector<16x128xf32>
      %23 = arith.mulf %16, %22 : vector<16x128xf32>
      %c0_15 = arith.constant 0 : index
      %c0_16 = arith.constant 0 : index
      %24 = vector.load %arg6[%c0_15, %c0_16] : memref<16x128xf32, #tpu.memory_space<vmem>>, vector<16x128xf32>
      tpu.vector_store %arg6[%c0_15, %c0_16], %23 {strides = array<i32>} : memref<16x128xf32, #tpu.memory_space<vmem>>, vector<16x128xf32>,
    } else {
    }
    return
  }
  func.func @transform_0(%arg0: i32, %arg1: i32, %arg2: i32) -> (i32, i32) {
    %c0_i32 = arith.constant 0 : i32
    return %arg1, %arg2 : i32, i32
  }
  func.func @transform_1(%arg0: i32, %arg1: i32, %arg2: i32) -> (i32, i32) {
    %c0_i32 = arith.constant 0 : i32
    return %arg2, %arg0 : i32, i32
  }
  func.func @transform_2(%arg0: i32, %arg1: i32, %arg2: i32) -> (i32, i32) {
    %c0_i32 = arith.constant 0 : i32
    %c0_i32_0 = arith.constant 0 : i32
    return %c0_i32, %arg0 : i32, i32
  }
  func.func @transform_3(%arg0: i32, %arg1: i32, %arg2: i32) -> (i32, i32) {
    %c0_i32 = arith.constant 0 : i32
    return %arg1, %arg0 : i32, i32
  }
}

</mosaic_0001>

<llo_original>
// kernel: tpu_custom_call.1
$region0: #{tpu_custom_call.1}
  #allocation0 [shape = 'u32[]', space=smem, size = 0x4, offset = 0x4, fixed_abs, tag = 'smem constant byte address 0x4 - core index']
  #allocation1 [shape = 'u32[72,128]{1,0:T(1,128)}', space=vmem, size = 0x9000, scoped, tag = 'internal scratch']
  #allocation2 [shape = 'f32[16,256]{1,0:T(8,128)}', space=vmem, size = 0x4000, scoped, tag = 'scratch operand']
  %s0 = inlined_call_operand.hbm [shape: f32[16,32], index: 0, kind: input, shape index: {}]
  %s1 = inlined_call_operand.hbm [shape: f32[32,256], index: 1, kind: input, shape index: {}]
  %s2 = inlined_call_operand.hbm [shape: f32[1,256], index: 2, kind: input, shape index: {}]
  %s3 = inlined_call_operand.hbm [shape: f32[16,128], index: 3, kind: output, shape index: {}]
  %s4 = sld [smem:[#allocation0]]
  $region42: #{tpu_custom_call.1} parent=0
    _
  %s6 = ssub.s32 1, %s4
  %s7 = scalar_select 0, %s6, %s4
  $region1: #{tpu_custom_call.1} parent=0
    #allocation3 [shape = 'u8[8192]{0}', space=vmem, size = 0x2000, scoped, tag = 'input window, operand 0, single buffered']
    #allocation4 [shape = 's32[1]{0}', space=sflag, size = 0x4, scoped, tag = 'scoped memory for tpu_custom_call.1']
    #allocation5 [shape = 's32[1]{0}', space=sflag, size = 0x4, scoped, tag = 'scoped memory for tpu_custom_call.1']
    #allocation6 [shape = 'u8[32768]{0}', space=vmem, size = 0x8000, scoped, tag = 'input window, operand 1, single buffered']
    #allocation7 [shape = 's32[1]{0}', space=sflag, size = 0x4, scoped, tag = 'scoped memory for tpu_custom_call.1']
    #allocation8 [shape = 'u8[1024]{0}', space=vmem, size = 0x400, scoped, tag = 'input window, operand 2, single buffered']
    #allocation9 [shape = 'u8[8192]{0}', space=vmem, size = 0x2000, scoped, tag = 'output window, operand 0, single buffered']
    %8 = vsyncpa [#allocation4], 0
    %9 = vsyncpa [#allocation7], 0
    %10 = vsyncpa [#allocation5], 0
    // Predicated region
    $region2: #{tpu_custom_call.1} parent=1 // pred_check
      _
    $region3: #{tpu_custom_call.1} parent=1 // pred_check_branch
      %12 = sbr.rel (0) target = $region5
    $region4: #{tpu_custom_call.1} parent=1 // pred_region
      %14 = vsyncadd [#allocation4], 0
      %s15 = sshll.u32 %s0, 4
      %s16 = int_to_ptr.hbm [resolvable:$true] %s15
      %s17 = sshll.u32 [#allocation3], 4
      %s18 = int_to_ptr.vmem [resolvable:$true] %s17
      %23 = dma.hbm_to_vmem [thread:$0]  %s16, 256, %s18, [#allocation4], 128, 128, 8
    $region5: #{tpu_custom_call.1} parent=1 // pred_fallthru
      _
    // Predicated region
    $region6: #{tpu_custom_call.1} parent=1 // pred_check
      _
    $region7: #{tpu_custom_call.1} parent=1 // pred_check_branch
      %25 = sbr.rel (0) target = $region9
    $region8: #{tpu_custom_call.1} parent=1 // pred_region
      %27 = vsyncadd [#allocation7], 0
      %s28 = sshll.u32 %s1, 4
      %s29 = int_to_ptr.hbm [resolvable:$true] %s28
      %s30 = sshll.u32 [#allocation6], 4
      %s31 = int_to_ptr.vmem [resolvable:$true] %s30
      %36 = dma.hbm_to_vmem [thread:$0]  %s29, 1024, %s31, [#allocation7], 256, 256, 16
    $region9: #{tpu_custom_call.1} parent=1 // pred_fallthru
      _
    // Predicated region
    $region10: #{tpu_custom_call.1} parent=1 // pred_check
      _
    $region11: #{tpu_custom_call.1} parent=1 // pred_check_branch
      %38 = sbr.rel (0) target = $region13
    $region12: #{tpu_custom_call.1} parent=1 // pred_region
      %40 = vsyncadd [#allocation7], 0
      %s42 = sshll.u32 %s2, 4
      %s43 = int_to_ptr.hbm [resolvable:$true] %s42
      %s44 = sshll.u32 [#allocation8], 4
      %s45 = int_to_ptr.vmem [resolvable:$true] %s44
      %47 = dma.hbm_to_vmem [thread:$0]  %s43, 32, %s45, [#allocation7]
    $region13: #{tpu_custom_call.1} parent=1 // pred_fallthru
      _
    // Predicated region
    $region14: #{tpu_custom_call.1} parent=1 // pred_check
      _
    $region15: #{tpu_custom_call.1} parent=1 // pred_check_branch
      %49 = sbr.rel (0) target = $region17
    $region16: #{tpu_custom_call.1} parent=1 // pred_region
      %51 = dma.done [#allocation4], 256
    $region17: #{tpu_custom_call.1} parent=1 // pred_fallthru
      _
    // Predicated region
    $region18: #{tpu_custom_call.1} parent=1 // pred_check
      _
    $region19: #{tpu_custom_call.1} parent=1 // pred_check_branch
      %53 = sbr.rel (0) target = $region21
    $region20: #{tpu_custom_call.1} parent=1 // pred_region
      %55 = dma.done [#allocation7], 1024
    $region21: #{tpu_custom_call.1} parent=1 // pred_fallthru
      _
    // Predicated region
    $region22: #{tpu_custom_call.1} parent=1 // pred_check
      _
    $region23: #{tpu_custom_call.1} parent=1 // pred_check_branch
      %57 = sbr.rel (0) target = $region25
    $region24: #{tpu_custom_call.1} parent=1 // pred_region
      %59 = dma.done [#allocation7], 32
    $region25: #{tpu_custom_call.1} parent=1 // pred_fallthru
      _
    %p60 = scmp.eq.s32.totalorder 0, 0
    // Predicated region
    $region26: #{tpu_custom_call.1} parent=1 // pred_check
      %p61 = pneg %p60
    $region27: #{tpu_custom_call.1} parent=1 // pred_check_branch
      %63 = sbr.rel (%p61) target = $region29
    $region28: #{tpu_custom_call.1} parent=1 // pred_region
      %64 = vst [vmem:[#allocation2] sm:$0xff] 0.0
      %65 = vst [vmem:[#allocation2 + $0x8] sm:$0xff] 0.0
      %66 = vst [vmem:[#allocation2 + $0x10] sm:$0xff] 0.0
      %67 = vst [vmem:[#allocation2 + $0x18] sm:$0xff] 0.0
    $region29: #{tpu_custom_call.1} parent=1 // pred_fallthru
      _
    %v68 = vld [vmem:[#allocation2] sm:$0xff]
    %v69 = vld [vmem:[#allocation2 + $0x8] sm:$0xff]
    %v70 = vld [vmem:[#allocation2 + $0x10] sm:$0xff]
    %v71 = vld [vmem:[#allocation2 + $0x18] sm:$0xff]
    %v72 = vld [vmem:[#allocation3] sm:$0xff]
    %v73 = vld [vmem:[#allocation3 + $0x8] sm:$0xff]
    %v74 = vld [vmem:[#allocation6] sm:$0xff]
    %v75 = vld [vmem:[#allocation6 + $0x8] sm:$0xff]
    %v76 = vld [vmem:[#allocation6 + $0x10] sm:$0xff]
    %v77 = vld [vmem:[#allocation6 + $0x18] sm:$0xff]
    %v78 = vld [vmem:[#allocation6 + $0x20] sm:$0xff]
    %v79 = vld [vmem:[#allocation6 + $0x28] sm:$0xff]
    %v80 = vld [vmem:[#allocation6 + $0x30] sm:$0xff]
    %v81 = vld [vmem:[#allocation6 + $0x38] sm:$0xff]
    %vm82 = vcmask 261120
    %v84 = vsel %vm82, %v72, 0
    %v87 = vsel %vm82, %v73, 0
    %89 = vmatpush.msra.mxu0 0.0
    %90 = vmatpush.msra.mxu0 0.0
    %91 = vmatpush.msra.mxu0 0.0
    %92 = vmatpush.msra.mxu0 0.0
    %93 = vmatpush.msra.mxu0 0.0
    %94 = vmatpush.msra.mxu0 0.0
    %95 = vmatpush.msra.mxu0 0.0
    %96 = vmatpush.msra.mxu0 0.0
    %97 = vmatpush.msra.mxu0 0.0
    %98 = vmatpush.msra.mxu0 0.0
    %99 = vmatpush.msra.mxu0 0.0
    %100 = vmatpush.msra.mxu0 0.0
    %101 = vmatpush.msra.mxu0 %v80
    %102 = vmatpush.msra.mxu0 %v78
    %103 = vmatpush.msra.mxu0 %v76
    %104 = vmatpush.msra.mxu0 %v74
    %105 = vmatmul.f32.gmra.mxu0 %v84
    %v106 = vpop.f32.mrf.mxu0
    %v107 = vadd.f32 0.0, %v106
    %108 = vmatmul.f32.gmra.mxu0 %v87
    %v109 = vpop.f32.mrf.mxu0
    %v110 = vadd.f32 0.0, %v109
    %111 = vdwg.mxu0
    %112 = vmatpush.msra.mxu0 0.0
    %113 = vmatpush.msra.mxu0 0.0
    %114 = vmatpush.msra.mxu0 0.0
    %115 = vmatpush.msra.mxu0 0.0
    %116 = vmatpush.msra.mxu0 0.0
    %117 = vmatpush.msra.mxu0 0.0
    %118 = vmatpush.msra.mxu0 0.0
    %119 = vmatpush.msra.mxu0 0.0
    %120 = vmatpush.msra.mxu0 0.0
    %121 = vmatpush.msra.mxu0 0.0
    %122 = vmatpush.msra.mxu0 0.0
    %123 = vmatpush.msra.mxu0 0.0
    %124 = vmatpush.msra.mxu0 %v81
    %125 = vmatpush.msra.mxu0 %v79
    %126 = vmatpush.msra.mxu0 %v77
    %127 = vmatpush.msra.mxu0 %v75
    %128 = vmatmul.f32.gmra.mxu0 %v84
    %v129 = vpop.f32.mrf.mxu0
    %v130 = vadd.f32 0.0, %v129
    %131 = vmatmul.f32.gmra.mxu0 %v87
    %v132 = vpop.f32.mrf.mxu0
    %v133 = vadd.f32 0.0, %v132
    %134 = vdwg.mxu0
    %v135 = vadd.f32 %v68, %v107
    %v136 = vadd.f32 %v69, %v130
    %v137 = vadd.f32 %v70, %v110
    %v138 = vadd.f32 %v71, %v133
    %139 = vst [vmem:[#allocation2] sm:$0xff] %v135
    %140 = vst [vmem:[#allocation2 + $0x8] sm:$0xff] %v136
    %141 = vst [vmem:[#allocation2 + $0x10] sm:$0xff] %v137
    %142 = vst [vmem:[#allocation2 + $0x18] sm:$0xff] %v138
    // Predicated region
    $region30: #{tpu_custom_call.1} parent=1 // pred_check
      %p143 = pneg %p60
    $region31: #{tpu_custom_call.1} parent=1 // pred_check_branch
      %145 = sbr.rel (%p143) target = $region33
    $region32: #{tpu_custom_call.1} parent=1 // pred_region
      %v146 = vld [vmem:[#allocation2] sm:$0xff]
      %v147 = vld [vmem:[#allocation2 + $0x8] sm:$0xff]
      %v148 = vld [vmem:[#allocation2 + $0x10] sm:$0xff]
      %v149 = vld [vmem:[#allocation2 + $0x18] sm:$0xff]
      %v150 = vld [vmem:[#allocation8] sm:$0x3]
      %v152 = vperm.slane %v150, 0
      %v153 = vperm.slane %v150, 1
      %v156 = vadd.f32 %v146, %v152
      %v157 = vadd.f32 %v147, %v153
      %v158 = vadd.f32 %v148, %v152
      %v159 = vadd.f32 %v149, %v153
      %v160 = vxor.u32 %v157, 2147483648
      %v161 = vxor.u32 %v159, 2147483648
      %v162 = vmul.f32 %v160, 1.442695
      %v163 = vpow.pop %v162
      %v164 = vmul.f32 %v161, 1.442695
      %v165 = vpow.pop %v164
      %v166 = vadd.f32 %v163, 1.0
      %v167 = vadd.f32 %v165, 1.0
      %v168 = vrcp.pop %v166
      %v169 = vmul.f32 %v166, %v168
      %v170 = vsub.f32 1.0, %v169
      %v171 = vmul.f32 %v168, %v170
      %v172 = vadd.f32 %v168, %v171
      %vm173 = vweird.f32 %v166
      %vm174 = vweird.f32 %v168
      %vm175 = vmor %vm173, %vm174
      %v176 = vsel %vm175, %v168, %v172
      %v177 = vand.u32 2147483647, %v166
      %vm178 = vcmp.eq.f32.partialorder %v177, 8.507059e+37
      %v179 = vand.u32 %v166, 2147483648
      %v180 = vor.u32 1.1754944e-38, %v179
      %v181 = vsel %vm178, %v180, %v176
      %v182 = vmul.f32 1.0, %v181
      %v183 = vrcp.pop %v167
      %v184 = vmul.f32 %v167, %v183
      %v185 = vsub.f32 1.0, %v184
      %v186 = vmul.f32 %v183, %v185
      %v187 = vadd.f32 %v183, %v186
      %vm188 = vweird.f32 %v167
      %vm189 = vweird.f32 %v183
      %vm190 = vmor %vm188, %vm189
      %v191 = vsel %vm190, %v183, %v187
      %v192 = vand.u32 2147483647, %v167
      %vm193 = vcmp.eq.f32.partialorder %v192, 8.507059e+37
      %v194 = vand.u32 %v167, 2147483648
      %v195 = vor.u32 1.1754944e-38, %v194
      %v196 = vsel %vm193, %v195, %v191
      %v197 = vmul.f32 1.0, %v196
      %v198 = vmul.f32 %v156, %v182
      %v199 = vmul.f32 %v158, %v197
      %200 = vst [vmem:[#allocation9] sm:$0xff] %v198
      %201 = vst [vmem:[#allocation9 + $0x8] sm:$0xff] %v199
    $region33: #{tpu_custom_call.1} parent=1 // pred_fallthru
      _
    // Predicated region
    $region34: #{tpu_custom_call.1} parent=1 // pred_check
      _
    $region35: #{tpu_custom_call.1} parent=1 // pred_check_branch
      %203 = sbr.rel (0) target = $region37
    $region36: #{tpu_custom_call.1} parent=1 // pred_region
      %205 = vsyncadd [#allocation5], 0
      %s206 = sshll.u32 [#allocation9], 4
      %s207 = int_to_ptr.vmem [resolvable:$true] %s206
      %s208 = sshll.u32 %s3, 4
      %s209 = int_to_ptr.hbm [resolvable:$true] %s208
      %214 = dma.vmem_to_hbm [thread:$0]  %s207, 256, %s209, [#allocation5], 128, 128, 8
    $region37: #{tpu_custom_call.1} parent=1 // pred_fallthru
      _
    // Predicated region
    $region38: #{tpu_custom_call.1} parent=1 // pred_check
      _
    $region39: #{tpu_custom_call.1} parent=1 // pred_check_branch
      %216 = sbr.rel (0) target = $region41
    $region40: #{tpu_custom_call.1} parent=1 // pred_region
      %218 = dma.done [#allocation5], 256
    $region41: #{tpu_custom_call.1} parent=1 // pred_fallthru
      _
    %219 = vsyncpa [#allocation4], 1
    %220 = vsyncpa [#allocation7], 1
    %221 = vsyncpa [#allocation5], 1

</llo_original>
